<compile_context>
chip_gen: v6e
topology: v6e:2x2x1
jax: 0.10.0
libtpu: 0.0.40
codegen_flags: <defaults>
</compile_context>

<pallas_src>
import numpy as np
import jax
import jax.numpy as jnp
from jax.experimental import pallas as pl
from jax.experimental.pallas import tpu as pltpu

LANES = 128  # TPU vreg lane count


# ----------------------------- glue (plain JAX / numpy) -----------------------------

def get_weight(epoch, beta=0.9999, cls_num_list=()):
    """Per-class weights, identical math to the PyTorch get_weight()."""
    cls_num_list = list(cls_num_list)
    if epoch <= 10:
        per_cls_weights = np.ones([2], dtype=np.float64)
    else:
        effective_num = 1.0 - np.power(beta, cls_num_list)
        per_cls_weights = (1.0 - beta) / np.array(effective_num)
    per_cls_weights = per_cls_weights / np.sum(per_cls_weights) * len(cls_num_list)
    return jnp.asarray(per_cls_weights, dtype=jnp.float32)


# ----------------------------------- Pallas kernel -----------------------------------

def _focal_power(q, gamma):
    """(1 - p_t)^gamma with gamma a static Python float baked into the kernel."""
    if gamma == 0.0:
        return None                      # factor == 1, skip entirely
    gi = int(gamma)
    if float(gi) == float(gamma) and 0 < gi <= 8:
        r = q
        for _ in range(gi - 1):          # small integer gamma -> VPU multiplies
            r = r * q
        return r
    return jnp.power(q, jnp.float32(gamma))   # non-integer gamma fallback (EUP)


def _make_focal_loss_kernel(alpha, gamma, block_rows):
    alpha = float(alpha)
    gamma = float(gamma)
    assert block_rows % 8 == 0

    def kernel(w_sref, x_ref, t_ref, out_ref):
        # w_sref: (2,) per-class weights in SMEM (scalar prefetch)
        x = x_ref[...]                               # (block_rows, 128) f32 logits
        t = t_ref[...]                               # (block_rows, 128) f32 targets

        # Stable log-probabilities: one exp + one log1p per element.
        #   log(sigmoid(x))   = min(x, 0) - log1p(exp(-|x|))
        #   log(1-sigmoid(x)) = log(sigmoid(x)) - x
        log_p = jnp.minimum(x, 0.0) - jnp.log1p(jnp.exp(-jnp.abs(x)))
        log_1mp = log_p - x

        is_pos = t == 1.0
        log_pt = jnp.where(is_pos, log_p, log_1mp)   # log(p_t)
        log_q = jnp.where(is_pos, log_1mp, log_p)    # log(1 - p_t)

        # per-sample class weight selected from the 2-entry SMEM table
        w = jnp.where(is_pos, w_sref[1], w_sref[0])

        loss = (-alpha) * log_pt * w
        factor = _focal_power(jnp.exp(log_q), gamma)   # (1 - p_t)^gamma
        if factor is not None:
            loss = loss * factor

        # targets outside {0, 1} (including padding) contribute zero,
        # matching the torch boolean-mask assignment semantics.
        valid = jnp.logical_or(is_pos, t == 0.0)
        loss = jnp.where(valid, loss, 0.0)

        # Partial reduce on the VPU only: fold sublane groups of 8 together and
        # emit a lane-dense (1, 8, 128) partial-sum block. Final reduce in JAX.
        partial = jnp.sum(loss.reshape(block_rows // 8, 8, LANES), axis=0)
        out_ref[...] = partial.reshape(1, 8, LANES)

    return kernel


def focal_loss_pallas(logits, target, per_cls_weight, *, alpha=1.0, gamma=0.0,
                      block_rows=512):
    """Mean focal loss over (N, 1) logits / binary targets (TPU Pallas)."""
    n = int(logits.size)                              # mean denominator = N * D
    x = logits.reshape(-1).astype(jnp.float32)
    t = target.reshape(-1).astype(jnp.float32)

    # Lane-dense tiling: pad to a whole number of (block_rows, 128) blocks.
    rows_needed = -(-n // LANES)
    if rows_needed <= block_rows:
        block_rows = max(8, ((rows_needed + 7) // 8) * 8)
    total_rows = -(-rows_needed // block_rows) * block_rows
    padded = total_rows * LANES
    if padded != n:
        x = jnp.pad(x, (0, padded - n))                          # logits pad -> 0
        t = jnp.pad(t, (0, padded - n), constant_values=-1.0)    # target pad -> masked out
    x = x.reshape(total_rows, LANES)
    t = t.reshape(total_rows, LANES)

    grid = (total_rows // block_rows,)
    kernel = _make_focal_loss_kernel(alpha, gamma, block_rows)

    partials = pl.pallas_call(
        kernel,
        out_shape=jax.ShapeDtypeStruct((grid[0], 8, LANES), jnp.float32),
        grid_spec=pltpu.PrefetchScalarGridSpec(
            num_scalar_prefetch=1,                    # per-class weights -> SMEM
            grid=grid,
            in_specs=[
                pl.BlockSpec((block_rows, LANES), lambda i, w: (i, 0)),   # logits
                pl.BlockSpec((block_rows, LANES), lambda i, w: (i, 0)),   # targets
            ],
            out_specs=pl.BlockSpec((1, 8, LANES), lambda i, w: (i, 0, 0)),
        ),
        compiler_params=pltpu.CompilerParams(
            dimension_semantics=("parallel",),        # independent blocks -> both v7x TCs
        ),
    )(per_cls_weight.astype(jnp.float32), x, t)

    # Tiny epilogue reduce + mean in JAX (padding contributed exact zeros).
    return jnp.sum(partials) / jnp.float32(n)


# ----------------------------------- reference (JAX) -----------------------------------

def focal_loss_ref(logits, target, per_cls_weight, alpha, gamma):
    p = jax.nn.sigmoid(logits.astype(jnp.float32))
    t = target.astype(jnp.float32)
    w = per_cls_weight[target.astype(jnp.int32).reshape(-1)].reshape(-1, 1)
    pos = -alpha * (1.0 - p) ** gamma * jnp.log(p) * w
    neg = -alpha * p ** gamma * jnp.log(1.0 - p) * w
    loss = jnp.where(t == 1.0, pos, jnp.where(t == 0.0, neg, 0.0))
    return jnp.mean(loss)


# ---------------------------------------- main ----------------------------------------

if __name__ == "__main__":
    key = jax.random.PRNGKey(0)
    k_x, k_t = jax.random.split(key)

    N = 256                      # samples, (N, 1) logits like the torch module
    alpha = 1.0
    gamma = 2.0                  # FocalLoss(gamma=2)
    epoch = 12                   # > 10 -> effective-number class weights
    cls_num_list = [200, 56]     # synthetic class counts for get_weight

    logits = jax.random.normal(k_x, (N, 1), dtype=jnp.float32)
    target = jax.random.bernoulli(k_t, p=0.25, shape=(N, 1)).astype(jnp.float32)

    per_cls_weight = get_weight(epoch, cls_num_list=cls_num_list)

    loss = focal_loss_pallas(logits, target, per_cls_weight,
                             alpha=alpha, gamma=gamma)
    loss = jax.block_until_ready(loss)

    ref = focal_loss_ref(logits, target, per_cls_weight, alpha, gamma)
    np.testing.assert_allclose(np.asarray(loss), np.asarray(ref), rtol=1e-5, atol=1e-6)

    print("KERNEL_OK")
</pallas_src>

<mosaic_0001>
module attributes {stable_mosaic.version = 11 : i64} {
  func.func @kernel(%arg0: i32, %arg1: memref<2xf32, #tpu.memory_space<smem>>, %arg2: memref<8x128xf32, #tpu.memory_space<vmem>>, %arg3: memref<8x128xf32, #tpu.memory_space<vmem>>, %arg4: memref<1x8x128xf32, #tpu.memory_space<vmem>>) attributes {dimension_semantics = [#tpu.dimension_semantics<parallel>], iteration_bounds = array<i64: 1>, scalar_prefetch = 1 : i64, scratch_operands = 0 : i64, tpu.core_type = #tpu.core_type<tc>, window_params = [{transform_indices = @transform_0, window_bounds = array<i64: 8, 128>}, {transform_indices = @transform_1, window_bounds = array<i64: 8, 128>}, {transform_indices = @transform_2, window_bounds = array<i64: 1, 8, 128>}]} {
    %c0 = arith.constant 0 : index
    %c0_0 = arith.constant 0 : index
    %0 = vector.load %arg2[%c0, %c0_0] : memref<8x128xf32, #tpu.memory_space<vmem>>, vector<8x128xf32>
    %c0_1 = arith.constant 0 : index
    %c0_2 = arith.constant 0 : index
    %1 = vector.load %arg3[%c0_1, %c0_2] : memref<8x128xf32, #tpu.memory_space<vmem>>, vector<8x128xf32>
    %cst = arith.constant 0.000000e+00 : f32
    %2 = vector.broadcast %cst : f32 to vector<8x128xf32>
    %3 = arith.minimumf %0, %2 : vector<8x128xf32>
    %4 = math.absf %0 : vector<8x128xf32>
    %cst_3 = arith.constant 0.000000e+00 : f32
    %5 = vector.broadcast %cst_3 : f32 to vector<8x128xf32>
    %6 = arith.subf %5, %4 : vector<8x128xf32>
    %7 = math.exp %6 : vector<8x128xf32>
    %8 = math.log1p %7 : vector<8x128xf32>
    %9 = arith.subf %3, %8 : vector<8x128xf32>
    %10 = arith.subf %9, %0 : vector<8x128xf32>
    %cst_4 = arith.constant 1.000000e+00 : f32
    %11 = vector.broadcast %cst_4 : f32 to vector<8x128xf32>
    %12 = arith.cmpf oeq, %1, %11 : vector<8x128xf32>
    %13 = arith.select %12, %9, %10 : vector<8x128xi1>, vector<8x128xf32>
    %14 = arith.select %12, %10, %9 : vector<8x128xi1>, vector<8x128xf32>
    %c1 = arith.constant 1 : index
    %15 = memref.load %arg1[%c1] : memref<2xf32, #tpu.memory_space<smem>>
    %c0_5 = arith.constant 0 : index
    %16 = memref.load %arg1[%c0_5] : memref<2xf32, #tpu.memory_space<smem>>
    %17 = vector.broadcast %15 : f32 to vector<8x128xf32>
    %18 = vector.broadcast %16 : f32 to vector<8x128xf32>
    %19 = arith.select %12, %17, %18 : vector<8x128xi1>, vector<8x128xf32>
    %cst_6 = arith.constant -1.000000e+00 : f32
    %20 = vector.broadcast %cst_6 : f32 to vector<8x128xf32>
    %21 = arith.mulf %20, %13 : vector<8x128xf32>
    %22 = arith.mulf %21, %19 : vector<8x128xf32>
    %23 = math.exp %14 : vector<8x128xf32>
    %24 = arith.mulf %23, %23 : vector<8x128xf32>
    %25 = arith.mulf %22, %24 : vector<8x128xf32>
    %cst_7 = arith.constant 0.000000e+00 : f32
    %26 = vector.broadcast %cst_7 : f32 to vector<8x128xf32>
    %27 = arith.cmpf oeq, %1, %26 : vector<8x128xf32>
    %28 = arith.ori %12, %27 : vector<8x128xi1>
    %cst_8 = arith.constant 0.000000e+00 : f32
    %29 = vector.broadcast %cst_8 : f32 to vector<8x128xf32>
    %30 = arith.select %28, %25, %29 : vector<8x128xi1>, vector<8x128xf32>
    %31 = vector.shape_cast %30 : vector<8x128xf32> to vector<1x8x128xf32>
    %cst_9 = arith.constant dense<0.000000e+00> : vector<8x128xf32>
    %32 = vector.multi_reduction <add>, %31, %cst_9 [0] : vector<1x8x128xf32> to vector<8x128xf32>
    %33 = vector.shape_cast %32 : vector<8x128xf32> to vector<1x8x128xf32>
    %c0_10 = arith.constant 0 : index
    %c0_11 = arith.constant 0 : index
    %c0_12 = arith.constant 0 : index
    %34 = vector.load %arg4[%c0_10, %c0_11, %c0_12] : memref<1x8x128xf32, #tpu.memory_space<vmem>>, vector<1x8x128xf32>
    tpu.vector_store %arg4[%c0_10, %c0_11, %c0_12], %33 {strides = array<i32>} : memref<1x8x128xf32, #tpu.memory_space<vmem>>, vector<1x8x128xf32>,
    return
  }
  func.func @transform_0(%arg0: i32, %arg1: memref<2xf32, #tpu.memory_space<smem>>) -> (i32, i32) {
    %c0_i32 = arith.constant 0 : i32
    %c0_i32_0 = arith.constant 0 : i32
    return %arg0, %c0_i32 : i32, i32
  }
  func.func @transform_1(%arg0: i32, %arg1: memref<2xf32, #tpu.memory_space<smem>>) -> (i32, i32) {
    %c0_i32 = arith.constant 0 : i32
    %c0_i32_0 = arith.constant 0 : i32
    return %arg0, %c0_i32 : i32, i32
  }
  func.func @transform_2(%arg0: i32, %arg1: memref<2xf32, #tpu.memory_space<smem>>) -> (i32, i32, i32) {
    %c0_i32 = arith.constant 0 : i32
    %c0_i32_0 = arith.constant 0 : i32
    %c0_i32_1 = arith.constant 0 : i32
    return %arg0, %c0_i32, %c0_i32_0 : i32, i32, i32
  }
}

</mosaic_0001>

<llo_original>
// kernel: tpu_custom_call.1
$region0: #{tpu_custom_call.1}
  #allocation0 [shape = 'u32[]', space=smem, size = 0x4, offset = 0x4, fixed_abs, tag = 'smem constant byte address 0x4 - core index']
  #allocation1 [shape = 'u32[144,128]{1,0:T(1,128)}', space=vmem, size = 0x12000, scoped, tag = 'internal scratch']
  #allocation2 [shape = 's32[1]{0}', space=sflag, size = 0x4, scoped, tag = 'scoped memory for tpu_custom_call.1']
  #allocation3 [shape = 'u8[512]{0}', space=smem, size = 0x200, scoped, tag = 'prefetched SMEM operand 0']
  %s0 = inlined_call_operand.hbm [shape: f32[2], index: 0, kind: input, shape index: {}]
  %s1 = inlined_call_operand.hbm [shape: f32[8,128], index: 1, kind: input, shape index: {}]
  %s2 = inlined_call_operand.hbm [shape: f32[8,128], index: 2, kind: input, shape index: {}]
  %s3 = inlined_call_operand.hbm [shape: f32[1,8,128], index: 3, kind: output, shape index: {}]
  %s4 = sld [smem:[#allocation0]]
  $region26: #{tpu_custom_call.1} parent=0
    _
  %s6 = ssub.s32 1, %s4
  %s7 = scalar_select 0, %s6, %s4
  %9 = dma.hbm_to_smem %s0, 16, [#allocation3], [#allocation2]
  %10 = dma.done [#allocation2], 16
  %11 = sfence
  $region1: #{tpu_custom_call.1} parent=0
    #allocation4 [shape = 'u8[4096]{0}', space=vmem, size = 0x1000, scoped, tag = 'input window, operand 1, single buffered']
    #allocation5 [shape = 's32[1]{0}', space=sflag, size = 0x4, scoped, tag = 'scoped memory for tpu_custom_call.1']
    #allocation6 [shape = 's32[1]{0}', space=sflag, size = 0x4, scoped, tag = 'scoped memory for tpu_custom_call.1']
    #allocation7 [shape = 'u8[4096]{0}', space=vmem, size = 0x1000, scoped, tag = 'input window, operand 2, single buffered']
    #allocation8 [shape = 's32[1]{0}', space=sflag, size = 0x4, scoped, tag = 'scoped memory for tpu_custom_call.1']
    #allocation9 [shape = 'u8[4096]{0}', space=vmem, size = 0x1000, scoped, tag = 'output window, operand 0, single buffered']
    %12 = vsyncpa [#allocation5], 0
    %13 = vsyncpa [#allocation8], 0
    %14 = vsyncpa [#allocation6], 0
    // Predicated region
    $region2: #{tpu_custom_call.1} parent=1 // pred_check
      _
    $region3: #{tpu_custom_call.1} parent=1 // pred_check_branch
      %16 = sbr.rel (0) target = $region5
    $region4: #{tpu_custom_call.1} parent=1 // pred_region
      %s18 = ssub.s32 128, 128
      %19 = vsyncadd [#allocation5], %s18
      %s21 = sshll.u32 [#allocation4], 4
      %s22 = int_to_ptr.vmem [resolvable:$true] %s21
      %24 = dma.hbm_to_vmem [thread:$0]  %s1, 128, %s22, [#allocation5]
    $region5: #{tpu_custom_call.1} parent=1 // pred_fallthru
      _
    // Predicated region
    $region6: #{tpu_custom_call.1} parent=1 // pred_check
      _
    $region7: #{tpu_custom_call.1} parent=1 // pred_check_branch
      %26 = sbr.rel (0) target = $region9
    $region8: #{tpu_custom_call.1} parent=1 // pred_region
      %s28 = ssub.s32 128, 128
      %29 = vsyncadd [#allocation8], %s28
      %s31 = sshll.u32 [#allocation7], 4
      %s32 = int_to_ptr.vmem [resolvable:$true] %s31
      %34 = dma.hbm_to_vmem [thread:$0]  %s2, 128, %s32, [#allocation8]
    $region9: #{tpu_custom_call.1} parent=1 // pred_fallthru
      _
    // Predicated region
    $region10: #{tpu_custom_call.1} parent=1 // pred_check
      _
    $region11: #{tpu_custom_call.1} parent=1 // pred_check_branch
      %36 = sbr.rel (0) target = $region13
    $region12: #{tpu_custom_call.1} parent=1 // pred_region
      %37 = dma.done [#allocation5], 128
    $region13: #{tpu_custom_call.1} parent=1 // pred_fallthru
      _
    // Predicated region
    $region14: #{tpu_custom_call.1} parent=1 // pred_check
      _
    $region15: #{tpu_custom_call.1} parent=1 // pred_check_branch
      %39 = sbr.rel (0) target = $region17
    $region16: #{tpu_custom_call.1} parent=1 // pred_region
      %40 = dma.done [#allocation8], 128
    $region17: #{tpu_custom_call.1} parent=1 // pred_fallthru
      _
    %v41 = vld [vmem:[#allocation4] sm:$0xff]
    %v42 = vld [vmem:[#allocation7] sm:$0xff]
    %v43 = vmin.f32 %v41, 0.0
    %v44 = vand.u32 2147483647, %v41
    %v45 = vsub.f32 0.0, %v44
    %v46 = vmul.f32 %v45, 1.442695
    %v47 = vpow.pop %v46
    %v48 = vadd.f32 %v47, 1.0
    %v49 = vlog2.pop %v48
    %v50 = vmul.f32 %v49, 0.6931472
    %v51 = vmul.f32 -0.5, %v47
    %v52 = vadd.f32 %v51, 1.0
    %v53 = vmul.f32 %v52, %v47
    %v54 = vand.u32 2147483647, %v47
    %vm55 = vcmp.lt.f32.partialorder %v54, 0.0004427343
    %v56 = vsel %vm55, %v53, %v50
    %v57 = vsub.f32 %v43, %v56
    %v58 = vsub.f32 %v57, %v41
    %vm59 = vcmp.eq.f32.partialorder %v42, 1.0
    %v60 = vsel %vm59, %v57, %v58
    %v61 = vsel %vm59, %v58, %v57
    %s62 = sld [smem:[#allocation3 + $0x1]]
    %s63 = sld [smem:[#allocation3]]
    %v64 = vstv %s62
    %v65 = vstv %s63
    %v66 = vsel %vm59, %v64, %v65
    %v67 = vmul.f32 %v60, -1.0
    %v68 = vmul.f32 %v67, %v66
    %v69 = vmul.f32 %v61, 1.442695
    %v70 = vpow.pop %v69
    %v71 = vmul.f32 %v70, %v70
    %v72 = vmul.f32 %v68, %v71
    %vm73 = vcmp.eq.f32.partialorder %v42, 0.0
    %vm74 = vmor %vm59, %vm73
    %v75 = vsel %vm74, %v72, 0.0
    %v76 = vadd.f32 %v75, 0.0
    %77 = vst [vmem:[#allocation9] sm:$0xff] %v76
    // Predicated region
    $region18: #{tpu_custom_call.1} parent=1 // pred_check
      _
    $region19: #{tpu_custom_call.1} parent=1 // pred_check_branch
      %79 = sbr.rel (0) target = $region21
    $region20: #{tpu_custom_call.1} parent=1 // pred_region
      %s81 = ssub.s32 128, 128
      %82 = vsyncadd [#allocation6], %s81
      %s84 = sshll.u32 [#allocation9], 4
      %s85 = int_to_ptr.vmem [resolvable:$true] %s84
      %87 = dma.vmem_to_hbm [thread:$0]  %s85, 128, %s3, [#allocation6]
    $region21: #{tpu_custom_call.1} parent=1 // pred_fallthru
      _
    // Predicated region
    $region22: #{tpu_custom_call.1} parent=1 // pred_check
      _
    $region23: #{tpu_custom_call.1} parent=1 // pred_check_branch
      %89 = sbr.rel (0) target = $region25
    $region24: #{tpu_custom_call.1} parent=1 // pred_region
      %90 = dma.done [#allocation6], 128
    $region25: #{tpu_custom_call.1} parent=1 // pred_fallthru
      _
    %91 = vsyncpa [#allocation5], 1
    %92 = vsyncpa [#allocation8], 1
    %93 = vsyncpa [#allocation6], 1

</llo_original>
